<compile_context>
chip_gen: v7x
topology: tpu7x:2x2x1
jax: 0.10.0
libtpu: 0.0.40
codegen_flags: <defaults>
</compile_context>

<pallas_src>
import jax
import jax.numpy as jnp
from jax.experimental import pallas as pl
from jax.experimental.pallas import tpu as pltpu

HIDDEN = 32
INPUT = 14
OUT_DIM = 2

D_PAD = 16      # pad input features 14 -> 16 (aligned contraction dim)
OUT_PAD = 128   # pad FC output 2 -> 128 lanes (lane-dense stores)


def _round_up(n, m):
    return ((n + m - 1) // m) * m


def lstm_kernel(x_ref,      # (T, Bp, D_PAD)     time-major input
                w0_ref,     # (D_PAD + H, 4H)    [W_ih0.T (zero-padded rows) ; W_hh0.T]
                b0_ref,     # (1, 4H)            b_ih0 + b_hh0
                w1_ref,     # (2H, 4H)           [W_ih1.T ; W_hh1.T]
                b1_ref,     # (1, 4H)            b_ih1 + b_hh1
                wfc_ref,    # (T*H, OUT_PAD)     W_fc.T zero-padded columns
                bfc_ref,    # (1, OUT_PAD)
                out_ref,    # (Bp, OUT_PAD)
                hseq_ref):  # (Bp, T*H) scratch: layer-1 hidden states, flat layout
    T, B, _ = x_ref.shape
    H = HIDDEN

    # Hoist weight / bias loads (and the bias broadcast) out of the time loop.
    w0 = w0_ref[...]
    w1 = w1_ref[...]
    b0 = jnp.broadcast_to(b0_ref[...], (B, 4 * H))
    b1 = jnp.broadcast_to(b1_ref[...], (B, 4 * H))

    def cell(gates, c_prev):
        # Two full-width EUP passes over all 4H gate lanes; gate selection is
        # plain static lane slicing of the results.  PyTorch gate order: i, f, g, o.
        sig = jax.nn.sigmoid(gates)
        th = jnp.tanh(gates)
        i = sig[:, 0 * H:1 * H]
        f = sig[:, 1 * H:2 * H]
        g = th[:, 2 * H:3 * H]
        o = sig[:, 3 * H:4 * H]
        c = f * c_prev + i * g
        h = o * jnp.tanh(c)
        return h, c

    zeros = jnp.zeros((B, H), jnp.float32)

    def body(t, carry):
        h0, c0, h1, c1 = carry
        x_t = x_ref[t]                                         # (B, D_PAD)

        # layer 0: fused input + recurrent matmul (one MXU call)
        xh0 = jnp.concatenate([x_t, h0], axis=1)               # (B, D_PAD + H)
        g0 = jnp.dot(xh0, w0, preferred_element_type=jnp.float32) + b0
        h0, c0 = cell(g0, c0)

        # layer 1: fused input + recurrent matmul (one MXU call)
        xh1 = jnp.concatenate([h0, h1], axis=1)                # (B, 2H)
        g1 = jnp.dot(xh1, w1, preferred_element_type=jnp.float32) + b1
        h1, c1 = cell(g1, c1)

        # store directly in the flattened (B, T*H) layout the FC expects
        hseq_ref[:, pl.ds(t * H, H)] = h1
        return h0, c0, h1, c1

    # TODO(synk): if T ever grows large, switch unroll=True to a bounded unroll (e.g. 4)
    # and hoist the layer-0 input projection out of the recurrence.
    jax.lax.fori_loop(0, T, body, (zeros, zeros, zeros, zeros), unroll=True)

    # FC epilogue: lane-dense (Bp, OUT_PAD) output store.
    out_ref[...] = (jnp.dot(hseq_ref[...], wfc_ref[...],
                            preferred_element_type=jnp.float32)
                    + bfc_ref[...])


def init_params(key):
    """Deterministic init mirroring PyTorch shapes: U(-1/sqrt(H), 1/sqrt(H))."""
    H = HIDDEN
    bound = 1.0 / jnp.sqrt(jnp.float32(H))
    keys = jax.random.split(key, 10)
    u = lambda k, shape: jax.random.uniform(k, shape, jnp.float32, -bound, bound)
    return {
        "w_ih0": u(keys[0], (4 * H, INPUT)),   # PyTorch layout (4H, in)
        "w_hh0": u(keys[1], (4 * H, H)),
        "b_ih0": u(keys[2], (4 * H,)),
        "b_hh0": u(keys[3], (4 * H,)),
        "w_ih1": u(keys[4], (4 * H, H)),
        "w_hh1": u(keys[5], (4 * H, H)),
        "b_ih1": u(keys[6], (4 * H,)),
        "b_hh1": u(keys[7], (4 * H,)),
        "w_fc":  u(keys[8], (OUT_DIM, H)),     # PyTorch layout (out, in)
        "b_fc":  u(keys[9], (OUT_DIM,)),
    }


def lstm_forward(x, params):
    """x: (B, T, INPUT) float32 -> (B, OUT_DIM) float32."""
    B, T, D = x.shape
    H = HIDDEN
    assert D == INPUT
    # out.view(B, -1) -> Linear requires T * H == fc in_features (i.e. T == 1 here).
    assert params["w_fc"].shape[1] == T * H, \
        "out.view(B,-1) followed by Linear(32,2) requires seq_len == 1"

    Bp = _round_up(max(B, 8), 8)   # pad batch to a multiple of 8 sublanes

    # time-major + pad features / batch with zeros
    x_tm = jnp.transpose(x, (1, 0, 2)).astype(jnp.float32)          # (T, B, D)
    x_tm = jnp.pad(x_tm, ((0, 0), (0, Bp - B), (0, D_PAD - D)))     # (T, Bp, D_PAD)

    # fused, pre-transposed weights (every in-kernel matmul is row-major (in, out))
    wih0_t = jnp.pad(params["w_ih0"].T, ((0, D_PAD - INPUT), (0, 0)))   # (D_PAD, 4H)
    w0 = jnp.concatenate([wih0_t, params["w_hh0"].T], axis=0)           # (D_PAD+H, 4H)
    b0 = (params["b_ih0"] + params["b_hh0"]).reshape(1, 4 * H)
    w1 = jnp.concatenate([params["w_ih1"].T, params["w_hh1"].T], axis=0)  # (2H, 4H)
    b1 = (params["b_ih1"] + params["b_hh1"]).reshape(1, 4 * H)

    # lane-dense FC: pad the 2 output columns to 128
    wfc = jnp.pad(params["w_fc"].T, ((0, 0), (0, OUT_PAD - OUT_DIM)))   # (T*H, OUT_PAD)
    bfc = jnp.pad(params["b_fc"].reshape(1, OUT_DIM),
                  ((0, 0), (0, OUT_PAD - OUT_DIM)))                     # (1, OUT_PAD)

    vmem = pl.BlockSpec(memory_space=pltpu.MemorySpace.VMEM)
    out = pl.pallas_call(
        lstm_kernel,
        out_shape=jax.ShapeDtypeStruct((Bp, OUT_PAD), jnp.float32),
        in_specs=[vmem] * 7,
        out_specs=vmem,
        scratch_shapes=[pltpu.VMEM((Bp, T * H), jnp.float32)],
    )(x_tm, w0, b0, w1, b1, wfc, bfc)
    return out[:B, :OUT_DIM]


def lstm_reference(x, params):
    """Pure-JAX reference implementing the same PyTorch semantics."""
    B, T, _ = x.shape
    H = HIDDEN

    def cell(x_t, h, c, w_ih, w_hh, b_ih, b_hh):
        g = x_t @ w_ih.T + h @ w_hh.T + b_ih + b_hh
        i = jax.nn.sigmoid(g[:, 0 * H:1 * H])
        f = jax.nn.sigmoid(g[:, 1 * H:2 * H])
        gg = jnp.tanh(g[:, 2 * H:3 * H])
        o = jax.nn.sigmoid(g[:, 3 * H:4 * H])
        c = f * c + i * gg
        h = o * jnp.tanh(c)
        return h, c

    h0 = c0 = h1 = c1 = jnp.zeros((B, H), jnp.float32)
    outs = []
    for t in range(T):
        h0, c0 = cell(x[:, t, :], h0, c0, params["w_ih0"], params["w_hh0"],
                      params["b_ih0"], params["b_hh0"])
        h1, c1 = cell(h0, h1, c1, params["w_ih1"], params["w_hh1"],
                      params["b_ih1"], params["b_hh1"])
        outs.append(h1)
    out_seq = jnp.stack(outs, axis=1)                 # (B, T, H)
    flat = out_seq.reshape(B, -1)                     # (B, T*H)
    return flat @ params["w_fc"].T + params["b_fc"]


if __name__ == "__main__":
    key = jax.random.PRNGKey(0)
    pkey, xkey = jax.random.split(key)
    params = init_params(pkey)

    B, T = 2, 1   # T must be 1 for the module's view(B,-1) -> Linear(32,2) to be valid
    x = jax.random.normal(xkey, (B, T, INPUT), dtype=jnp.float32)

    out = lstm_forward(x, params)
    out = jax.block_until_ready(out)

    ref = lstm_reference(x, params)
    assert out.shape == (B, OUT_DIM)
    assert jnp.allclose(out, ref, atol=1e-4, rtol=1e-4), (out, ref)

    print("KERNEL_OK")
</pallas_src>

<mosaic_0001>
module attributes {stable_mosaic.version = 11 : i64} {
  func.func @lstm_kernel(%arg0: memref<1x8x16xf32, #tpu.memory_space<vmem>>, %arg1: memref<48x128xf32, #tpu.memory_space<vmem>>, %arg2: memref<1x128xf32, #tpu.memory_space<vmem>>, %arg3: memref<64x128xf32, #tpu.memory_space<vmem>>, %arg4: memref<1x128xf32, #tpu.memory_space<vmem>>, %arg5: memref<32x128xf32, #tpu.memory_space<vmem>>, %arg6: memref<1x128xf32, #tpu.memory_space<vmem>>, %arg7: memref<8x128xf32, #tpu.memory_space<vmem>>, %arg8: memref<8x32xf32, #tpu.memory_space<vmem>>) attributes {dimension_semantics = [], scalar_prefetch = 0 : i64, scratch_operands = 1 : i64, tpu.core_type = #tpu.core_type<tc>} {
    %c0 = arith.constant 0 : index
    %c0_0 = arith.constant 0 : index
    %0 = vector.load %arg1[%c0, %c0_0] : memref<48x128xf32, #tpu.memory_space<vmem>>, vector<48x128xf32>
    %c0_1 = arith.constant 0 : index
    %c0_2 = arith.constant 0 : index
    %1 = vector.load %arg3[%c0_1, %c0_2] : memref<64x128xf32, #tpu.memory_space<vmem>>, vector<64x128xf32>
    %c0_3 = arith.constant 0 : index
    %c0_4 = arith.constant 0 : index
    %2 = vector.load %arg2[%c0_3, %c0_4] : memref<1x128xf32, #tpu.memory_space<vmem>>, vector<1x128xf32>
    %3 = vector.shape_cast %2 : vector<1x128xf32> to vector<1x128xf32>
    %4 = vector.broadcast %3 : vector<1x128xf32> to vector<8x128xf32>
    %c0_5 = arith.constant 0 : index
    %c0_6 = arith.constant 0 : index
    %5 = vector.load %arg4[%c0_5, %c0_6] : memref<1x128xf32, #tpu.memory_space<vmem>>, vector<1x128xf32>
    %6 = vector.shape_cast %5 : vector<1x128xf32> to vector<1x128xf32>
    %7 = vector.broadcast %6 : vector<1x128xf32> to vector<8x128xf32>
    %cst = arith.constant 0.000000e+00 : f32
    %8 = vector.broadcast %cst : f32 to vector<8x32xf32>
    %c0_i32 = arith.constant 0 : i32
    %9 = arith.index_cast %c0_i32 : i32 to index
    %c0_7 = arith.constant 0 : index
    %c0_8 = arith.constant 0 : index
    %10 = vector.load %arg0[%9, %c0_7, %c0_8] : memref<1x8x16xf32, #tpu.memory_space<vmem>>, vector<1x8x16xf32>
    %11 = vector.shape_cast %10 : vector<1x8x16xf32> to vector<8x16xf32>
    %12 = tpu.concatenate %11, %8 in 1 : vector<8x16xf32>, vector<8x32xf32> -> vector<8x48xf32>
    %cst_9 = arith.constant dense<0.000000e+00> : vector<8x128xf32>
    %13 = tpu.matmul %12, %0, %cst_9 {dimension_numbers = #tpu.dot_dimension_numbers<[1], [0], [0], [1], [0, 0, 1, 1], [], []>} : vector<8x48xf32>, vector<48x128xf32>, vector<8x128xf32> -> vector<8x128xf32>
    %14 = arith.addf %13, %4 : vector<8x128xf32>
    %15 = arith.negf %14 : vector<8x128xf32>
    %16 = math.exp %15 : vector<8x128xf32>
    %cst_10 = arith.constant 1.000000e+00 : f32
    %17 = vector.broadcast %cst_10 : f32 to vector<8x128xf32>
    %18 = arith.addf %17, %16 : vector<8x128xf32>
    %19 = arith.divf %17, %18 : vector<8x128xf32>
    %20 = math.tanh %14 : vector<8x128xf32>
    %21 = vector.extract_strided_slice %19 {offsets = [0, 0], sizes = [8, 32], strides = [1, 1]} : vector<8x128xf32> to vector<8x32xf32>
    %22 = vector.extract_strided_slice %19 {offsets = [0, 32], sizes = [8, 32], strides = [1, 1]} : vector<8x128xf32> to vector<8x32xf32>
    %23 = vector.extract_strided_slice %20 {offsets = [0, 64], sizes = [8, 32], strides = [1, 1]} : vector<8x128xf32> to vector<8x32xf32>
    %24 = vector.extract_strided_slice %19 {offsets = [0, 96], sizes = [8, 32], strides = [1, 1]} : vector<8x128xf32> to vector<8x32xf32>
    %25 = arith.mulf %22, %8 : vector<8x32xf32>
    %26 = arith.mulf %21, %23 : vector<8x32xf32>
    %27 = arith.addf %25, %26 : vector<8x32xf32>
    %28 = math.tanh %27 : vector<8x32xf32>
    %29 = arith.mulf %24, %28 : vector<8x32xf32>
    %30 = tpu.concatenate %29, %8 in 1 : vector<8x32xf32>, vector<8x32xf32> -> vector<8x64xf32>
    %cst_11 = arith.constant dense<0.000000e+00> : vector<8x128xf32>
    %31 = tpu.matmul %30, %1, %cst_11 {dimension_numbers = #tpu.dot_dimension_numbers<[1], [0], [0], [1], [0, 0, 1, 1], [], []>} : vector<8x64xf32>, vector<64x128xf32>, vector<8x128xf32> -> vector<8x128xf32>
    %32 = arith.addf %31, %7 : vector<8x128xf32>
    %33 = arith.negf %32 : vector<8x128xf32>
    %34 = math.exp %33 : vector<8x128xf32>
    %cst_12 = arith.constant 1.000000e+00 : f32
    %35 = vector.broadcast %cst_12 : f32 to vector<8x128xf32>
    %36 = arith.addf %35, %34 : vector<8x128xf32>
    %37 = arith.divf %35, %36 : vector<8x128xf32>
    %38 = math.tanh %32 : vector<8x128xf32>
    %39 = vector.extract_strided_slice %37 {offsets = [0, 0], sizes = [8, 32], strides = [1, 1]} : vector<8x128xf32> to vector<8x32xf32>
    %40 = vector.extract_strided_slice %37 {offsets = [0, 32], sizes = [8, 32], strides = [1, 1]} : vector<8x128xf32> to vector<8x32xf32>
    %41 = vector.extract_strided_slice %38 {offsets = [0, 64], sizes = [8, 32], strides = [1, 1]} : vector<8x128xf32> to vector<8x32xf32>
    %42 = vector.extract_strided_slice %37 {offsets = [0, 96], sizes = [8, 32], strides = [1, 1]} : vector<8x128xf32> to vector<8x32xf32>
    %43 = arith.mulf %40, %8 : vector<8x32xf32>
    %44 = arith.mulf %39, %41 : vector<8x32xf32>
    %45 = arith.addf %43, %44 : vector<8x32xf32>
    %46 = math.tanh %45 : vector<8x32xf32>
    %47 = arith.mulf %42, %46 : vector<8x32xf32>
    %c32_i32 = arith.constant 32 : i32
    %48 = arith.muli %c0_i32, %c32_i32 : i32
    %c0_13 = arith.constant 0 : index
    %49 = arith.index_cast %48 : i32 to index
    %50 = vector.load %arg8[%c0_13, %49] : memref<8x32xf32, #tpu.memory_space<vmem>>, vector<8x32xf32>
    tpu.vector_store %arg8[%c0_13, %49], %47 {strides = array<i32>} : memref<8x32xf32, #tpu.memory_space<vmem>>, vector<8x32xf32>,
    %c1_i32 = arith.constant 1 : i32
    %c0_14 = arith.constant 0 : index
    %c0_15 = arith.constant 0 : index
    %51 = vector.load %arg8[%c0_14, %c0_15] : memref<8x32xf32, #tpu.memory_space<vmem>>, vector<8x32xf32>
    %c0_16 = arith.constant 0 : index
    %c0_17 = arith.constant 0 : index
    %52 = vector.load %arg5[%c0_16, %c0_17] : memref<32x128xf32, #tpu.memory_space<vmem>>, vector<32x128xf32>
    %cst_18 = arith.constant dense<0.000000e+00> : vector<8x128xf32>
    %53 = tpu.matmul %51, %52, %cst_18 {dimension_numbers = #tpu.dot_dimension_numbers<[1], [0], [0], [1], [0, 0, 1, 1], [], []>} : vector<8x32xf32>, vector<32x128xf32>, vector<8x128xf32> -> vector<8x128xf32>
    %c0_19 = arith.constant 0 : index
    %c0_20 = arith.constant 0 : index
    %54 = vector.load %arg6[%c0_19, %c0_20] : memref<1x128xf32, #tpu.memory_space<vmem>>, vector<1x128xf32>
    %55 = vector.broadcast %54 : vector<1x128xf32> to vector<8x128xf32>
    %56 = arith.addf %53, %55 : vector<8x128xf32>
    %c0_21 = arith.constant 0 : index
    %c0_22 = arith.constant 0 : index
    %57 = vector.load %arg7[%c0_21, %c0_22] : memref<8x128xf32, #tpu.memory_space<vmem>>, vector<8x128xf32>
    tpu.vector_store %arg7[%c0_21, %c0_22], %56 {strides = array<i32>} : memref<8x128xf32, #tpu.memory_space<vmem>>, vector<8x128xf32>,
    return
  }
}

</mosaic_0001>

<llo_original>
// kernel: tpu_custom_call.1
$region0: #{tpu_custom_call.1}
  #allocation0 [shape = 'u32[]', space=smem, size = 0x4, offset = 0x4, fixed_abs, tag = 'smem constant byte address 0x4 - core index']
  #allocation1 [shape = 'u32[144,128]{1,0:T(1,128)}', space=vmem, size = 0x12000, scoped, tag = 'internal scratch']
  #allocation2 [shape = 'f32[8,32]{1,0:T(8,128)}', space=vmem, size = 0x1000, scoped, tag = 'scratch operand']
  %s0 = inlined_call_operand.hbm [shape: f32[1,8,16], index: 0, kind: input, shape index: {}]
  %s1 = inlined_call_operand.hbm [shape: f32[48,128], index: 1, kind: input, shape index: {}]
  %s2 = inlined_call_operand.vmem [shape: f32[1,128], index: 2, kind: input, shape index: {}]
  %s3 = inlined_call_operand.hbm [shape: f32[64,128], index: 3, kind: input, shape index: {}]
  %s4 = inlined_call_operand.vmem [shape: f32[1,128], index: 4, kind: input, shape index: {}]
  %s5 = inlined_call_operand.hbm [shape: f32[32,128], index: 5, kind: input, shape index: {}]
  %s6 = inlined_call_operand.vmem [shape: f32[1,128], index: 6, kind: input, shape index: {}]
  %s7 = inlined_call_operand.hbm [shape: f32[8,128], index: 7, kind: output, shape index: {}]
  %s8 = sld [smem:[#allocation0]]
  $region54: #{tpu_custom_call.1} parent=0
    _
  %s10 = ssub.s32 1, %s8
  %s11 = scalar_select 0, %s10, %s8
  $region1: #{tpu_custom_call.1} parent=0
    #allocation3 [shape = 'u8[4096]{0}', space=vmem, size = 0x1000, scoped, tag = 'input window, operand 0, single buffered']
    #allocation4 [shape = 's32[1]{0}', space=sflag, size = 0x4, scoped, tag = 'scoped memory for tpu_custom_call.1']
    #allocation5 [shape = 's32[1]{0}', space=sflag, size = 0x4, scoped, tag = 'scoped memory for tpu_custom_call.1']
    #allocation6 [shape = 'u8[24576]{0}', space=vmem, size = 0x6000, scoped, tag = 'input window, operand 1, single buffered']
    #allocation7 [shape = 's32[1]{0}', space=sflag, size = 0x4, scoped, tag = 'scoped memory for tpu_custom_call.1']
    #allocation8 [shape = 'u8[32768]{0}', space=vmem, size = 0x8000, scoped, tag = 'input window, operand 3, single buffered']
    #allocation9 [shape = 'u8[16384]{0}', space=vmem, size = 0x4000, scoped, tag = 'input window, operand 5, single buffered']
    #allocation10 [shape = 's32[1]{0}', space=sflag, size = 0x4, scoped, tag = 'scoped memory for tpu_custom_call.1']
    #allocation11 [shape = 'u8[4096]{0}', space=vmem, size = 0x1000, scoped, tag = 'output window, operand 0, single buffered']
    %12 = vsyncpa [#allocation4], 0
    %13 = vsyncpa [#allocation7], 0
    %14 = vsyncpa [#allocation10], 0
    %15 = vsyncpa [#allocation5], 0
    // Predicated region
    $region2: #{tpu_custom_call.1} parent=1 // pred_check
      _
    $region3: #{tpu_custom_call.1} parent=1 // pred_check_branch
      %17 = sbr.rel (0) target = $region5
    $region4: #{tpu_custom_call.1} parent=1 // pred_region
      %s19 = ssub.s32 128, 128
      %20 = vsyncadd [#allocation4], %s19
      %s22 = sshll.u32 [#allocation3], 4
      %s23 = int_to_ptr.vmem [resolvable:$true] %s22
      %25 = dma.hbm_to_vmem [thread:$0]  %s0, 128, %s23, [#allocation4]
    $region5: #{tpu_custom_call.1} parent=1 // pred_fallthru
      _
    // Predicated region
    $region6: #{tpu_custom_call.1} parent=1 // pred_check
      _
    $region7: #{tpu_custom_call.1} parent=1 // pred_check_branch
      %27 = sbr.rel (0) target = $region9
    $region8: #{tpu_custom_call.1} parent=1 // pred_region
      %s29 = ssub.s32 768, 768
      %30 = vsyncadd [#allocation7], %s29
      %s31 = sshll.u32 [#allocation6], 4
      %s32 = int_to_ptr.vmem [resolvable:$true] %s31
      %37 = dma.hbm_to_vmem [thread:$0]  %s1, 768, %s32, [#allocation7], 128, 128, 8
    $region9: #{tpu_custom_call.1} parent=1 // pred_fallthru
      _
    // Predicated region
    $region10: #{tpu_custom_call.1} parent=1 // pred_check
      _
    $region11: #{tpu_custom_call.1} parent=1 // pred_check_branch
      %39 = sbr.rel (0) target = $region13
    $region12: #{tpu_custom_call.1} parent=1 // pred_region
      _
    $region13: #{tpu_custom_call.1} parent=1 // pred_fallthru
      _
    // Predicated region
    $region14: #{tpu_custom_call.1} parent=1 // pred_check
      _
    $region15: #{tpu_custom_call.1} parent=1 // pred_check_branch
      %41 = sbr.rel (0) target = $region17
    $region16: #{tpu_custom_call.1} parent=1 // pred_region
      %s43 = ssub.s32 1024, 1024
      %44 = vsyncadd [#allocation7], %s43
      %s45 = sshll.u32 [#allocation8], 4
      %s46 = int_to_ptr.vmem [resolvable:$true] %s45
      %51 = dma.hbm_to_vmem [thread:$0]  %s3, 1024, %s46, [#allocation7], 128, 128, 8
    $region17: #{tpu_custom_call.1} parent=1 // pred_fallthru
      _
    // Predicated region
    $region18: #{tpu_custom_call.1} parent=1 // pred_check
      _
    $region19: #{tpu_custom_call.1} parent=1 // pred_check_branch
      %53 = sbr.rel (0) target = $region21
    $region20: #{tpu_custom_call.1} parent=1 // pred_region
      _
    $region21: #{tpu_custom_call.1} parent=1 // pred_fallthru
      _
    // Predicated region
    $region22: #{tpu_custom_call.1} parent=1 // pred_check
      _
    $region23: #{tpu_custom_call.1} parent=1 // pred_check_branch
      %55 = sbr.rel (0) target = $region25
    $region24: #{tpu_custom_call.1} parent=1 // pred_region
      %s57 = ssub.s32 512, 512
      %58 = vsyncadd [#allocation10], %s57
      %s59 = sshll.u32 [#allocation9], 4
      %s60 = int_to_ptr.vmem [resolvable:$true] %s59
      %65 = dma.hbm_to_vmem [thread:$0]  %s5, 512, %s60, [#allocation10], 128, 128, 8
    $region25: #{tpu_custom_call.1} parent=1 // pred_fallthru
      _
    // Predicated region
    $region26: #{tpu_custom_call.1} parent=1 // pred_check
      _
    $region27: #{tpu_custom_call.1} parent=1 // pred_check_branch
      %67 = sbr.rel (0) target = $region29
    $region28: #{tpu_custom_call.1} parent=1 // pred_region
      _
    $region29: #{tpu_custom_call.1} parent=1 // pred_fallthru
      _
    // Predicated region
    $region30: #{tpu_custom_call.1} parent=1 // pred_check
      _
    $region31: #{tpu_custom_call.1} parent=1 // pred_check_branch
      %69 = sbr.rel (0) target = $region33
    $region32: #{tpu_custom_call.1} parent=1 // pred_region
      %70 = dma.done [#allocation4], 128
    $region33: #{tpu_custom_call.1} parent=1 // pred_fallthru
      _
    // Predicated region
    $region34: #{tpu_custom_call.1} parent=1 // pred_check
      _
    $region35: #{tpu_custom_call.1} parent=1 // pred_check_branch
      %72 = sbr.rel (0) target = $region37
    $region36: #{tpu_custom_call.1} parent=1 // pred_region
      %73 = dma.done [#allocation7], 768
    $region37: #{tpu_custom_call.1} parent=1 // pred_fallthru
      _
    // Predicated region
    $region38: #{tpu_custom_call.1} parent=1 // pred_check
      _
    $region39: #{tpu_custom_call.1} parent=1 // pred_check_branch
      %75 = sbr.rel (0) target = $region41
    $region40: #{tpu_custom_call.1} parent=1 // pred_region
      %76 = dma.done [#allocation7], 1024
    $region41: #{tpu_custom_call.1} parent=1 // pred_fallthru
      _
    // Predicated region
    $region42: #{tpu_custom_call.1} parent=1 // pred_check
      _
    $region43: #{tpu_custom_call.1} parent=1 // pred_check_branch
      %78 = sbr.rel (0) target = $region45
    $region44: #{tpu_custom_call.1} parent=1 // pred_region
      %79 = dma.done [#allocation10], 512
    $region45: #{tpu_custom_call.1} parent=1 // pred_fallthru
      _
    %v80 = vld [vmem:[#allocation6] sm:$0xff]
    %v81 = vld [vmem:[#allocation6 + $0x8] sm:$0xff]
    %v82 = vld [vmem:[#allocation6 + $0x10] sm:$0xff]
    %v83 = vld [vmem:[#allocation6 + $0x18] sm:$0xff]
    %v84 = vld [vmem:[#allocation6 + $0x20] sm:$0xff]
    %v85 = vld [vmem:[#allocation6 + $0x28] sm:$0xff]
    %v86 = vld [vmem:[#allocation8] sm:$0xff]
    %v87 = vld [vmem:[#allocation8 + $0x8] sm:$0xff]
    %v88 = vld [vmem:[#allocation8 + $0x10] sm:$0xff]
    %v89 = vld [vmem:[#allocation8 + $0x18] sm:$0xff]
    %v90 = vld [vmem:[#allocation8 + $0x20] sm:$0xff]
    %v91 = vld [vmem:[#allocation8 + $0x28] sm:$0xff]
    %v92 = vld [vmem:[#allocation8 + $0x30] sm:$0xff]
    %v93 = vld [vmem:[#allocation8 + $0x38] sm:$0xff]
    %v94 = vld [vmem:[%s2] sm:$0x1]
    %v96 = vlaneseq
    %v97 = vshrl.u32 %v96, 7
    %v98 = vsub.s32 0, %v97
    %v99 = vrot.slane %v94, %v98
    %v101 = vld [vmem:[%s4] sm:$0x1]
    %v103 = vlaneseq
    %v104 = vshrl.u32 %v103, 7
    %v105 = vsub.s32 0, %v104
    %v106 = vrot.slane %v101, %v105
    %v108 = vld [vmem:[#allocation3] sm:$0xff]
    %vm109 = vcmask 130048
    %v110 = vsel %vm109, %v108, 0.0
    %vm111 = vcmask 392192
    %v113 = vsel %vm111, %v110, 0
    %115 = vmatprep.subr.mxu0 0.0
    %116 = vmatpush1.msra.mxu0 %v80
    %117 = vmatprep.subr.mxu0 0.0
    %118 = vmatpush1.msra.mxu0 %v81
    %119 = vmatprep.subr.mxu0 0.0
    %120 = vmatpush1.msra.mxu0 %v82
    %121 = vmatprep.subr.mxu0 0.0
    %122 = vmatpush1.msra.mxu0 %v83
    %123 = vmatprep.subr.mxu0 0.0
    %124 = vmatpush1.msra.mxu0 %v84
    %125 = vmatprep.subr.mxu0 0.0
    %126 = vmatpush1.msra.mxu0 %v85
    %127 = vmatprep.subr.mxu0 0.0
    %128 = vmatpush1.msra.mxu0 0.0
    %129 = vmatprep.subr.mxu0 0.0
    %130 = vmatpush1.msra.mxu0 0.0
    %131 = vmatprep.subr.mxu0 0.0
    %132 = vmatpush1.msra.mxu0 0.0
    %133 = vmatprep.subr.mxu0 0.0
    %134 = vmatpush1.msra.mxu0 0.0
    %135 = vmatprep.subr.mxu0 0.0
    %136 = vmatpush1.msra.mxu0 0.0
    %137 = vmatprep.subr.mxu0 0.0
    %138 = vmatpush1.msra.mxu0 0.0
    %139 = vmatprep.subr.mxu0 0.0
    %140 = vmatpush1.msra.mxu0 0.0
    %141 = vmatprep.subr.mxu0 0.0
    %142 = vmatpush1.msra.mxu0 0.0
    %143 = vmatprep.subr.mxu0 0.0
    %144 = vmatpush1.msra.mxu0 0.0
    %145 = vmatprep.subr.mxu0 0.0
    %146 = vmatpush1.msra.mxu0 0.0
    %147 = vmatprep.subr.mxu0 0.0
    %148 = vmatpush1.msra.mxu0 0.0
    %149 = vmatprep.subr.mxu0 0.0
    %150 = vmatpush1.msra.mxu0 0.0
    %151 = vmatprep.subr.mxu0 0.0
    %152 = vmatpush1.msra.mxu0 0.0
    %153 = vmatprep.subr.mxu0 0.0
    %154 = vmatpush1.msra.mxu0 0.0
    %155 = vmatprep.subr.mxu0 0.0
    %156 = vmatpush1.msra.mxu0 0.0
    %157 = vmatprep.subr.mxu0 0.0
    %158 = vmatpush1.msra.mxu0 0.0
    %159 = vmatprep.subr.mxu0 0.0
    %160 = vmatpush1.msra.mxu0 0.0
    %161 = vmatprep.subr.mxu0 0.0
    %162 = vmatpush1.msra.mxu0 0.0
    %163 = vmatprep.subr.mxu0 0.0
    %164 = vmatpush1.msra.mxu0 0.0
    %165 = vmatprep.subr.mxu0 0.0
    %166 = vmatpush1.msra.mxu0 0.0
    %167 = vmatprep.subr.mxu0 0.0
    %168 = vmatpush1.msra.mxu0 0.0
    %169 = vmatprep.subr.mxu0 0.0
    %170 = vmatpush1.msra.mxu0 0.0
    %171 = vmatprep.subr.mxu0 0.0
    %172 = vmatpush1.msra.mxu0 0.0
    %173 = vmatprep.subr.mxu0 0.0
    %174 = vmatpush1.msra.mxu0 0.0
    %175 = vmatprep.subr.mxu0 0.0
    %176 = vmatpush1.msra.mxu0 0.0
    %177 = vmatprep.subr.mxu0 0.0
    %178 = vmatpush1.msra.mxu0 0.0
    %179 = vmatprep.mubr.f32.mxu0 0.0
    %180 = vmatmul.mubr.f32.gmra.mrb[0].mxu0 %v113
    %v181 = vpop.f32.mrb[0].mxu0
    %v182 = vadd.f32 %v99, %v181
    %v183 = vpop.f32.mrb[0].mxu0
    %184 = vdwg.mxu0
    %v185 = vxor.u32 %v182, 2147483648
    %v186 = vmul.f32 %v185, 1.442695
    %v187 = vpow.pop %v186
    %v188 = vadd.f32 %v187, 1.0
    %v189 = vrcp.pop %v188
    %v190 = vmul.f32 1.0, %v189
    %v191 = vtanh.pop %v182
    %v192 = vmul.f32 %v190, 0.0
    %194 = vrot.lane.b32.xlu0 %v191, 64
    %v195 = vpop.permute.xlu0 %194
    %v197 = vmul.f32 %v190, %v195
    %199 = vrot.lane.b32.xlu0 %v197, 32
    %v200 = vpop.permute.xlu0 %199
    %v202 = vadd.f32 %v192, %v200
    %v203 = vtanh.pop %v202
    %205 = vrot.lane.b32.xlu0 %v203, 64
    %v206 = vpop.permute.xlu0 %205
    %v208 = vmul.f32 %v190, %v206
    %210 = vrot.lane.b32.xlu0 %v208, 32
    %v211 = vpop.permute.xlu0 %210
    %vm213 = vcmask 261120
    %v214 = vsel %vm213, %v211, 0.0
    %vm215 = vcmask 523264
    %v217 = vsel %vm215, %v214, 0
    %219 = vmatprep.subr.mxu0 0.0
    %220 = vmatpush1.msra.mxu0 %v86
    %221 = vmatprep.subr.mxu0 0.0
    %222 = vmatpush1.msra.mxu0 %v87
    %223 = vmatprep.subr.mxu0 0.0
    %224 = vmatpush1.msra.mxu0 %v88
    %225 = vmatprep.subr.mxu0 0.0
    %226 = vmatpush1.msra.mxu0 %v89
    %227 = vmatprep.subr.mxu0 0.0
    %228 = vmatpush1.msra.mxu0 %v90
    %229 = vmatprep.subr.mxu0 0.0
    %230 = vmatpush1.msra.mxu0 %v91
    %231 = vmatprep.subr.mxu0 0.0
    %232 = vmatpush1.msra.mxu0 %v92
    %233 = vmatprep.subr.mxu0 0.0
    %234 = vmatpush1.msra.mxu0 %v93
    %235 = vmatprep.subr.mxu0 0.0
    %236 = vmatpush1.msra.mxu0 0.0
    %237 = vmatprep.subr.mxu0 0.0
    %238 = vmatpush1.msra.mxu0 0.0
    %239 = vmatprep.subr.mxu0 0.0
    %240 = vmatpush1.msra.mxu0 0.0
    %241 = vmatprep.subr.mxu0 0.0
    %242 = vmatpush1.msra.mxu0 0.0
    %243 = vmatprep.subr.mxu0 0.0
    %244 = vmatpush1.msra.mxu0 0.0
    %245 = vmatprep.subr.mxu0 0.0
    %246 = vmatpush1.msra.mxu0 0.0
    %247 = vmatprep.subr.mxu0 0.0
    %248 = vmatpush1.msra.mxu0 0.0
    %249 = vmatprep.subr.mxu0 0.0
    %250 = vmatpush1.msra.mxu0 0.0
    %251 = vmatprep.subr.mxu0 0.0
    %252 = vmatpush1.msra.mxu0 0.0
    %253 = vmatprep.subr.mxu0 0.0
    %254 = vmatpush1.msra.mxu0 0.0
    %255 = vmatprep.subr.mxu0 0.0
    %256 = vmatpush1.msra.mxu0 0.0
    %257 = vmatprep.subr.mxu0 0.0
    %258 = vmatpush1.msra.mxu0 0.0
    %259 = vmatprep.subr.mxu0 0.0
    %260 = vmatpush1.msra.mxu0 0.0
    %261 = vmatprep.subr.mxu0 0.0
    %262 = vmatpush1.msra.mxu0 0.0
    %263 = vmatprep.subr.mxu0 0.0
    %264 = vmatpush1.msra.mxu0 0.0
    %265 = vmatprep.subr.mxu0 0.0
    %266 = vmatpush1.msra.mxu0 0.0
    %267 = vmatprep.subr.mxu0 0.0
    %268 = vmatpush1.msra.mxu0 0.0
    %269 = vmatprep.subr.mxu0 0.0
    %270 = vmatpush1.msra.mxu0 0.0
    %271 = vmatprep.subr.mxu0 0.0
    %272 = vmatpush1.msra.mxu0 0.0
    %273 = vmatprep.subr.mxu0 0.0
    %274 = vmatpush1.msra.mxu0 0.0
    %275 = vmatprep.subr.mxu0 0.0
    %276 = vmatpush1.msra.mxu0 0.0
    %277 = vmatprep.subr.mxu0 0.0
    %278 = vmatpush1.msra.mxu0 0.0
    %279 = vmatprep.subr.mxu0 0.0
    %280 = vmatpush1.msra.mxu0 0.0
    %281 = vmatprep.subr.mxu0 0.0
    %282 = vmatpush1.msra.mxu0 0.0
    %283 = vmatprep.mubr.f32.mxu0 0.0
    %284 = vmatmul.mubr.f32.gmra.mrb[0].mxu0 %v217
    %v285 = vpop.f32.mrb[0].mxu0
    %v286 = vadd.f32 %v106, %v285
    %v287 = vpop.f32.mrb[0].mxu0
    %288 = vdwg.mxu0
    %v289 = vxor.u32 %v286, 2147483648
    %v290 = vmul.f32 %v289, 1.442695
    %v291 = vpow.pop %v290
    %v292 = vadd.f32 %v291, 1.0
    %v293 = vrcp.pop %v292
    %v294 = vmul.f32 1.0, %v293
    %v295 = vtanh.pop %v286
    %v296 = vmul.f32 %v294, 0.0
    %298 = vrot.lane.b32.xlu0 %v295, 64
    %v299 = vpop.permute.xlu0 %298
    %v301 = vmul.f32 %v294, %v299
    %303 = vrot.lane.b32.xlu0 %v301, 32
    %v304 = vpop.permute.xlu0 %303
    %v306 = vadd.f32 %v296, %v304
    %v307 = vtanh.pop %v306
    %309 = vrot.lane.b32.xlu0 %v307, 64
    %v310 = vpop.permute.xlu0 %309
    %v312 = vmul.f32 %v294, %v310
    %314 = vrot.lane.b32.xlu0 %v312, 32
    %v315 = vpop.permute.xlu0 %314
    %317 = vst.msk [vmem:[#allocation2] sm:$0xff] %vm213, %v315
    %v318 = vld [vmem:[#allocation2] sm:$0xff]
    %v319 = vld [vmem:[#allocation9] sm:$0xff]
    %v320 = vld [vmem:[#allocation9 + $0x8] sm:$0xff]
    %v321 = vld [vmem:[#allocation9 + $0x10] sm:$0xff]
    %v322 = vld [vmem:[#allocation9 + $0x18] sm:$0xff]
    %v323 = vld [vmem:[%s6] sm:$0x1]
    %v325 = vlaneseq
    %v326 = vshrl.u32 %v325, 7
    %v327 = vsub.s32 0, %v326
    %v328 = vrot.slane %v323, %v327
    %v331 = vsel %vm213, %v318, 0
    %333 = vmatprep.subr.mxu0 0.0
    %334 = vmatpush1.msra.mxu0 %v319
    %335 = vmatprep.subr.mxu0 0.0
    %336 = vmatpush1.msra.mxu0 %v320
    %337 = vmatprep.subr.mxu0 0.0
    %338 = vmatpush1.msra.mxu0 %v321
    %339 = vmatprep.subr.mxu0 0.0
    %340 = vmatpush1.msra.mxu0 %v322
    %341 = vmatprep.subr.mxu0 0.0
    %342 = vmatpush1.msra.mxu0 0.0
    %343 = vmatprep.subr.mxu0 0.0
    %344 = vmatpush1.msra.mxu0 0.0
    %345 = vmatprep.subr.mxu0 0.0
    %346 = vmatpush1.msra.mxu0 0.0
    %347 = vmatprep.subr.mxu0 0.0
    %348 = vmatpush1.msra.mxu0 0.0
    %349 = vmatprep.subr.mxu0 0.0
    %350 = vmatpush1.msra.mxu0 0.0
    %351 = vmatprep.subr.mxu0 0.0
    %352 = vmatpush1.msra.mxu0 0.0
    %353 = vmatprep.subr.mxu0 0.0
    %354 = vmatpush1.msra.mxu0 0.0
    %355 = vmatprep.subr.mxu0 0.0
    %356 = vmatpush1.msra.mxu0 0.0
    %357 = vmatprep.subr.mxu0 0.0
    %358 = vmatpush1.msra.mxu0 0.0
    %359 = vmatprep.subr.mxu0 0.0
    %360 = vmatpush1.msra.mxu0 0.0
    %361 = vmatprep.subr.mxu0 0.0
    %362 = vmatpush1.msra.mxu0 0.0
    %363 = vmatprep.subr.mxu0 0.0
    %364 = vmatpush1.msra.mxu0 0.0
    %365 = vmatprep.subr.mxu0 0.0
    %366 = vmatpush1.msra.mxu0 0.0
    %367 = vmatprep.subr.mxu0 0.0
    %368 = vmatpush1.msra.mxu0 0.0
    %369 = vmatprep.subr.mxu0 0.0
    %370 = vmatpush1.msra.mxu0 0.0
    %371 = vmatprep.subr.mxu0 0.0
    %372 = vmatpush1.msra.mxu0 0.0
    %373 = vmatprep.subr.mxu0 0.0
    %374 = vmatpush1.msra.mxu0 0.0
    %375 = vmatprep.subr.mxu0 0.0
    %376 = vmatpush1.msra.mxu0 0.0
    %377 = vmatprep.subr.mxu0 0.0
    %378 = vmatpush1.msra.mxu0 0.0
    %379 = vmatprep.subr.mxu0 0.0
    %380 = vmatpush1.msra.mxu0 0.0
    %381 = vmatprep.subr.mxu0 0.0
    %382 = vmatpush1.msra.mxu0 0.0
    %383 = vmatprep.subr.mxu0 0.0
    %384 = vmatpush1.msra.mxu0 0.0
    %385 = vmatprep.subr.mxu0 0.0
    %386 = vmatpush1.msra.mxu0 0.0
    %387 = vmatprep.subr.mxu0 0.0
    %388 = vmatpush1.msra.mxu0 0.0
    %389 = vmatprep.subr.mxu0 0.0
    %390 = vmatpush1.msra.mxu0 0.0
    %391 = vmatprep.subr.mxu0 0.0
    %392 = vmatpush1.msra.mxu0 0.0
    %393 = vmatprep.subr.mxu0 0.0
    %394 = vmatpush1.msra.mxu0 0.0
    %395 = vmatprep.subr.mxu0 0.0
    %396 = vmatpush1.msra.mxu0 0.0
    %397 = vmatprep.mubr.f32.mxu0 0.0
    %398 = vmatmul.mubr.f32.gmra.mrb[0].mxu0 %v331
    %v399 = vpop.f32.mrb[0].mxu0
    %v400 = vadd.f32 %v328, %v399
    %v401 = vpop.f32.mrb[0].mxu0
    %402 = vdwg.mxu0
    %403 = vst [vmem:[#allocation11] sm:$0xff] %v400
    // Predicated region
    $region46: #{tpu_custom_call.1} parent=1 // pred_check
      _
    $region47: #{tpu_custom_call.1} parent=1 // pred_check_branch
      %405 = sbr.rel (0) target = $region49
    $region48: #{tpu_custom_call.1} parent=1 // pred_region
      %s407 = ssub.s32 128, 128
      %408 = vsyncadd [#allocation5], %s407
      %s410 = sshll.u32 [#allocation11], 4
      %s411 = int_to_ptr.vmem [resolvable:$true] %s410
      %413 = dma.vmem_to_hbm [thread:$0]  %s411, 128, %s7, [#allocation5]
    $region49: #{tpu_custom_call.1} parent=1 // pred_fallthru
      _
    // Predicated region
    $region50: #{tpu_custom_call.1} parent=1 // pred_check
      _
    $region51: #{tpu_custom_call.1} parent=1 // pred_check_branch
      %415 = sbr.rel (0) target = $region53
    $region52: #{tpu_custom_call.1} parent=1 // pred_region
      %416 = dma.done [#allocation5], 128
    $region53: #{tpu_custom_call.1} parent=1 // pred_fallthru
      _
    %417 = vsyncpa [#allocation4], 1
    %418 = vsyncpa [#allocation7], 1
    %419 = vsyncpa [#allocation10], 1
    %420 = vsyncpa [#allocation5], 1

</llo_original>
